<compile_context>
chip_gen: v7x
topology: tpu7x:2x2x1
jax: 0.10.0
libtpu: 0.0.40
codegen_flags: <defaults>
</compile_context>

<pallas_src>
import jax
import jax.numpy as jnp
from jax import lax
from jax.experimental import pallas as pl
from jax.experimental.pallas import tpu as pltpu


# ----------------------------------------------------------------------------
# Pallas kernel: fused input projection + sequential LSTM recurrence.
# ----------------------------------------------------------------------------
def _lstm_kernel(embs_ref, wx_ref, wh_ref, b_ref, h_out_ref, c_out_ref, xz_ref):
    S = embs_ref.shape[0]
    M = h_out_ref.shape[1]

    # Batched input projection for all time steps: (S, Din) @ (Din, 4M) + b.
    xz_ref[...] = (
        jnp.dot(embs_ref[...], wx_ref[...], preferred_element_type=jnp.float32)
        + b_ref[...]
    )

    wh = wh_ref[...]  # (M, 4M) — resident for the whole recurrence

    def step(t, carry):
        h, c = carry                                               # (1, M) each
        gates = xz_ref[pl.ds(t, 1), :] + jnp.dot(
            h, wh, preferred_element_type=jnp.float32)             # (1, 4M)
        i = jax.nn.sigmoid(gates[:, 0 * M:1 * M])
        f = jax.nn.sigmoid(gates[:, 1 * M:2 * M])
        g = jnp.tanh(gates[:, 2 * M:3 * M])
        o = jax.nn.sigmoid(gates[:, 3 * M:4 * M])
        c = f * c + i * g
        h = o * jnp.tanh(c)
        return (h, c)

    h0 = jnp.zeros((1, M), jnp.float32)
    c0 = jnp.zeros((1, M), jnp.float32)
    # Short fixed trip count -> unroll for LLO scheduler visibility.
    h, c = lax.fori_loop(0, S, step, (h0, c0), unroll=True)

    h_out_ref[...] = h
    c_out_ref[...] = c


def _lstm_pallas(embs, wx, wh, b):
    S, _ = embs.shape
    M = wh.shape[0]

    def vmem():
        return pl.BlockSpec(memory_space=pltpu.MemorySpace.VMEM)

    return pl.pallas_call(
        _lstm_kernel,
        out_shape=(jax.ShapeDtypeStruct((1, M), jnp.float32),
                   jax.ShapeDtypeStruct((1, M), jnp.float32)),
        in_specs=[vmem(), vmem(), vmem(), vmem()],
        out_specs=(vmem(), vmem()),
        scratch_shapes=[pltpu.VMEM((S, 4 * M), jnp.float32)],
    )(embs, wx, wh, b)


@jax.jit
def lstm_encoder_forward(token_ids, emb, wx, wh, b):
    # Embedding gather stays in XLA outside the kernel (layout plumbing only).
    # nn.Dropout / nn.LSTM dropout are identity (inference / num_layers == 1).
    embs = jnp.take(emb, token_ids, axis=0)      # (S, Din)
    return _lstm_pallas(embs, wx, wh, b)          # (h_n[-1], c_n[-1])


# ----------------------------------------------------------------------------
# Pure-JAX reference (same math) for a one-time correctness check.
# ----------------------------------------------------------------------------
def lstm_encoder_ref(token_ids, emb, wx, wh, b):
    embs = jnp.take(emb, token_ids, axis=0)
    M = wh.shape[0]

    def step(carry, x):
        h, c = carry
        g = x[None, :] @ wx + h @ wh + b
        i = jax.nn.sigmoid(g[:, 0 * M:1 * M])
        f = jax.nn.sigmoid(g[:, 1 * M:2 * M])
        gg = jnp.tanh(g[:, 2 * M:3 * M])
        o = jax.nn.sigmoid(g[:, 3 * M:4 * M])
        c = f * c + i * gg
        h = o * jnp.tanh(c)
        return (h, c), None

    init = (jnp.zeros((1, M), jnp.float32), jnp.zeros((1, M), jnp.float32))
    (h, c), _ = lax.scan(step, init, embs)
    return h, c


# ----------------------------------------------------------------------------
# Demo / self-test.
# ----------------------------------------------------------------------------
if __name__ == "__main__":
    vocab_size, in_dim, mem_dim, seq_len = 20, 32, 32, 8

    key = jax.random.PRNGKey(0)
    k_emb, k_wih, k_whh, k_bih, k_bhh, k_tok = jax.random.split(key, 6)
    s = 0.1

    # Frozen embedding table; padding_idx = Constants.PAD == 0 -> zero row.
    emb = jax.random.normal(k_emb, (vocab_size, in_dim), jnp.float32) * s
    emb = emb.at[0].set(0.0)

    # PyTorch nn.LSTM params: weight_ih_l0 (4M, Din), weight_hh_l0 (4M, M),
    # bias_ih_l0 / bias_hh_l0 (4M,), gate order [i | f | g | o].
    # Stored transposed and with biases pre-summed (same math).
    w_ih = jax.random.normal(k_wih, (4 * mem_dim, in_dim), jnp.float32) * s
    w_hh = jax.random.normal(k_whh, (4 * mem_dim, mem_dim), jnp.float32) * s
    b_ih = jax.random.normal(k_bih, (4 * mem_dim,), jnp.float32) * s
    b_hh = jax.random.normal(k_bhh, (4 * mem_dim,), jnp.float32) * s
    wx = w_ih.T                    # (Din, 4M)
    wh = w_hh.T                    # (M, 4M)
    b = (b_ih + b_hh)[None, :]     # (1, 4M)

    token_ids = jax.random.randint(k_tok, (seq_len,), 1, vocab_size)

    # Forward: returns (h_n[-1], c_n[-1]) exactly like the torch module
    # (which names them out_cell_m / out_hidden).
    h, c = lstm_encoder_forward(token_ids, emb, wx, wh, b)
    jax.block_until_ready((h, c))

    assert h.shape == (1, mem_dim) and c.shape == (1, mem_dim)

    # One-time reference check (outside any hot path).
    h_ref, c_ref = lstm_encoder_ref(token_ids, emb, wx, wh, b)
    assert jnp.allclose(h, h_ref, atol=1e-5, rtol=1e-5)
    assert jnp.allclose(c, c_ref, atol=1e-5, rtol=1e-5)

    print("KERNEL_OK")
</pallas_src>

<mosaic_0001>
module attributes {stable_mosaic.version = 11 : i64} {
  func.func @_lstm_kernel(%arg0: memref<8x32xf32, #tpu.memory_space<vmem>>, %arg1: memref<32x128xf32, #tpu.memory_space<vmem>>, %arg2: memref<32x128xf32, #tpu.memory_space<vmem>>, %arg3: memref<1x128xf32, #tpu.memory_space<vmem>>, %arg4: memref<1x32xf32, #tpu.memory_space<vmem>>, %arg5: memref<1x32xf32, #tpu.memory_space<vmem>>, %arg6: memref<8x128xf32, #tpu.memory_space<vmem>>) attributes {dimension_semantics = [], scalar_prefetch = 0 : i64, scratch_operands = 1 : i64, tpu.core_type = #tpu.core_type<tc>} {
    %c0 = arith.constant 0 : index
    %c0_0 = arith.constant 0 : index
    %0 = vector.load %arg0[%c0, %c0_0] : memref<8x32xf32, #tpu.memory_space<vmem>>, vector<8x32xf32>
    %c0_1 = arith.constant 0 : index
    %c0_2 = arith.constant 0 : index
    %1 = vector.load %arg1[%c0_1, %c0_2] : memref<32x128xf32, #tpu.memory_space<vmem>>, vector<32x128xf32>
    %cst = arith.constant dense<0.000000e+00> : vector<8x128xf32>
    %2 = tpu.matmul %0, %1, %cst {dimension_numbers = #tpu.dot_dimension_numbers<[1], [0], [0], [1], [0, 0, 1, 1], [], []>} : vector<8x32xf32>, vector<32x128xf32>, vector<8x128xf32> -> vector<8x128xf32>
    %c0_3 = arith.constant 0 : index
    %c0_4 = arith.constant 0 : index
    %3 = vector.load %arg3[%c0_3, %c0_4] : memref<1x128xf32, #tpu.memory_space<vmem>>, vector<1x128xf32>
    %4 = vector.broadcast %3 : vector<1x128xf32> to vector<8x128xf32>
    %5 = arith.addf %2, %4 : vector<8x128xf32>
    %c0_5 = arith.constant 0 : index
    %c0_6 = arith.constant 0 : index
    %6 = vector.load %arg6[%c0_5, %c0_6] : memref<8x128xf32, #tpu.memory_space<vmem>>, vector<8x128xf32>
    tpu.vector_store %arg6[%c0_5, %c0_6], %5 {strides = array<i32>} : memref<8x128xf32, #tpu.memory_space<vmem>>, vector<8x128xf32>,
    %c0_7 = arith.constant 0 : index
    %c0_8 = arith.constant 0 : index
    %7 = vector.load %arg2[%c0_7, %c0_8] : memref<32x128xf32, #tpu.memory_space<vmem>>, vector<32x128xf32>
    %cst_9 = arith.constant 0.000000e+00 : f32
    %8 = vector.broadcast %cst_9 : f32 to vector<1x32xf32>
    %cst_10 = arith.constant 0.000000e+00 : f32
    %9 = vector.broadcast %cst_10 : f32 to vector<1x32xf32>
    %c0_i32 = arith.constant 0 : i32
    %10 = arith.index_cast %c0_i32 : i32 to index
    %c0_11 = arith.constant 0 : index
    %11 = vector.load %arg6[%10, %c0_11] : memref<8x128xf32, #tpu.memory_space<vmem>>, vector<1x128xf32>
    %cst_12 = arith.constant dense<0.000000e+00> : vector<1x128xf32>
    %12 = tpu.matmul %8, %7, %cst_12 {dimension_numbers = #tpu.dot_dimension_numbers<[1], [0], [0], [1], [0, 0, 1, 1], [], []>} : vector<1x32xf32>, vector<32x128xf32>, vector<1x128xf32> -> vector<1x128xf32>
    %13 = arith.addf %11, %12 : vector<1x128xf32>
    %14 = vector.extract_strided_slice %13 {offsets = [0, 0], sizes = [1, 32], strides = [1, 1]} : vector<1x128xf32> to vector<1x32xf32>
    %15 = arith.negf %14 : vector<1x32xf32>
    %16 = math.exp %15 : vector<1x32xf32>
    %cst_13 = arith.constant 1.000000e+00 : f32
    %17 = vector.broadcast %cst_13 : f32 to vector<1x32xf32>
    %18 = arith.addf %17, %16 : vector<1x32xf32>
    %19 = arith.divf %17, %18 : vector<1x32xf32>
    %20 = vector.extract_strided_slice %13 {offsets = [0, 32], sizes = [1, 32], strides = [1, 1]} : vector<1x128xf32> to vector<1x32xf32>
    %21 = arith.negf %20 : vector<1x32xf32>
    %22 = math.exp %21 : vector<1x32xf32>
    %cst_14 = arith.constant 1.000000e+00 : f32
    %23 = vector.broadcast %cst_14 : f32 to vector<1x32xf32>
    %24 = arith.addf %23, %22 : vector<1x32xf32>
    %25 = arith.divf %23, %24 : vector<1x32xf32>
    %26 = vector.extract_strided_slice %13 {offsets = [0, 64], sizes = [1, 32], strides = [1, 1]} : vector<1x128xf32> to vector<1x32xf32>
    %27 = math.tanh %26 : vector<1x32xf32>
    %28 = vector.extract_strided_slice %13 {offsets = [0, 96], sizes = [1, 32], strides = [1, 1]} : vector<1x128xf32> to vector<1x32xf32>
    %29 = arith.negf %28 : vector<1x32xf32>
    %30 = math.exp %29 : vector<1x32xf32>
    %cst_15 = arith.constant 1.000000e+00 : f32
    %31 = vector.broadcast %cst_15 : f32 to vector<1x32xf32>
    %32 = arith.addf %31, %30 : vector<1x32xf32>
    %33 = arith.divf %31, %32 : vector<1x32xf32>
    %34 = arith.mulf %25, %9 : vector<1x32xf32>
    %35 = arith.mulf %19, %27 : vector<1x32xf32>
    %36 = arith.addf %34, %35 : vector<1x32xf32>
    %37 = math.tanh %36 : vector<1x32xf32>
    %38 = arith.mulf %33, %37 : vector<1x32xf32>
    %c1_i32 = arith.constant 1 : i32
    %39 = arith.index_cast %c1_i32 : i32 to index
    %c0_16 = arith.constant 0 : index
    %40 = vector.load %arg6[%39, %c0_16] : memref<8x128xf32, #tpu.memory_space<vmem>>, vector<1x128xf32>
    %cst_17 = arith.constant dense<0.000000e+00> : vector<1x128xf32>
    %41 = tpu.matmul %38, %7, %cst_17 {dimension_numbers = #tpu.dot_dimension_numbers<[1], [0], [0], [1], [0, 0, 1, 1], [], []>} : vector<1x32xf32>, vector<32x128xf32>, vector<1x128xf32> -> vector<1x128xf32>
    %42 = arith.addf %40, %41 : vector<1x128xf32>
    %43 = vector.extract_strided_slice %42 {offsets = [0, 0], sizes = [1, 32], strides = [1, 1]} : vector<1x128xf32> to vector<1x32xf32>
    %44 = arith.negf %43 : vector<1x32xf32>
    %45 = math.exp %44 : vector<1x32xf32>
    %cst_18 = arith.constant 1.000000e+00 : f32
    %46 = vector.broadcast %cst_18 : f32 to vector<1x32xf32>
    %47 = arith.addf %46, %45 : vector<1x32xf32>
    %48 = arith.divf %46, %47 : vector<1x32xf32>
    %49 = vector.extract_strided_slice %42 {offsets = [0, 32], sizes = [1, 32], strides = [1, 1]} : vector<1x128xf32> to vector<1x32xf32>
    %50 = arith.negf %49 : vector<1x32xf32>
    %51 = math.exp %50 : vector<1x32xf32>
    %cst_19 = arith.constant 1.000000e+00 : f32
    %52 = vector.broadcast %cst_19 : f32 to vector<1x32xf32>
    %53 = arith.addf %52, %51 : vector<1x32xf32>
    %54 = arith.divf %52, %53 : vector<1x32xf32>
    %55 = vector.extract_strided_slice %42 {offsets = [0, 64], sizes = [1, 32], strides = [1, 1]} : vector<1x128xf32> to vector<1x32xf32>
    %56 = math.tanh %55 : vector<1x32xf32>
    %57 = vector.extract_strided_slice %42 {offsets = [0, 96], sizes = [1, 32], strides = [1, 1]} : vector<1x128xf32> to vector<1x32xf32>
    %58 = arith.negf %57 : vector<1x32xf32>
    %59 = math.exp %58 : vector<1x32xf32>
    %cst_20 = arith.constant 1.000000e+00 : f32
    %60 = vector.broadcast %cst_20 : f32 to vector<1x32xf32>
    %61 = arith.addf %60, %59 : vector<1x32xf32>
    %62 = arith.divf %60, %61 : vector<1x32xf32>
    %63 = arith.mulf %54, %36 : vector<1x32xf32>
    %64 = arith.mulf %48, %56 : vector<1x32xf32>
    %65 = arith.addf %63, %64 : vector<1x32xf32>
    %66 = math.tanh %65 : vector<1x32xf32>
    %67 = arith.mulf %62, %66 : vector<1x32xf32>
    %c2_i32 = arith.constant 2 : i32
    %68 = arith.index_cast %c2_i32 : i32 to index
    %c0_21 = arith.constant 0 : index
    %69 = vector.load %arg6[%68, %c0_21] : memref<8x128xf32, #tpu.memory_space<vmem>>, vector<1x128xf32>
    %cst_22 = arith.constant dense<0.000000e+00> : vector<1x128xf32>
    %70 = tpu.matmul %67, %7, %cst_22 {dimension_numbers = #tpu.dot_dimension_numbers<[1], [0], [0], [1], [0, 0, 1, 1], [], []>} : vector<1x32xf32>, vector<32x128xf32>, vector<1x128xf32> -> vector<1x128xf32>
    %71 = arith.addf %69, %70 : vector<1x128xf32>
    %72 = vector.extract_strided_slice %71 {offsets = [0, 0], sizes = [1, 32], strides = [1, 1]} : vector<1x128xf32> to vector<1x32xf32>
    %73 = arith.negf %72 : vector<1x32xf32>
    %74 = math.exp %73 : vector<1x32xf32>
    %cst_23 = arith.constant 1.000000e+00 : f32
    %75 = vector.broadcast %cst_23 : f32 to vector<1x32xf32>
    %76 = arith.addf %75, %74 : vector<1x32xf32>
    %77 = arith.divf %75, %76 : vector<1x32xf32>
    %78 = vector.extract_strided_slice %71 {offsets = [0, 32], sizes = [1, 32], strides = [1, 1]} : vector<1x128xf32> to vector<1x32xf32>
    %79 = arith.negf %78 : vector<1x32xf32>
    %80 = math.exp %79 : vector<1x32xf32>
    %cst_24 = arith.constant 1.000000e+00 : f32
    %81 = vector.broadcast %cst_24 : f32 to vector<1x32xf32>
    %82 = arith.addf %81, %80 : vector<1x32xf32>
    %83 = arith.divf %81, %82 : vector<1x32xf32>
    %84 = vector.extract_strided_slice %71 {offsets = [0, 64], sizes = [1, 32], strides = [1, 1]} : vector<1x128xf32> to vector<1x32xf32>
    %85 = math.tanh %84 : vector<1x32xf32>
    %86 = vector.extract_strided_slice %71 {offsets = [0, 96], sizes = [1, 32], strides = [1, 1]} : vector<1x128xf32> to vector<1x32xf32>
    %87 = arith.negf %86 : vector<1x32xf32>
    %88 = math.exp %87 : vector<1x32xf32>
    %cst_25 = arith.constant 1.000000e+00 : f32
    %89 = vector.broadcast %cst_25 : f32 to vector<1x32xf32>
    %90 = arith.addf %89, %88 : vector<1x32xf32>
    %91 = arith.divf %89, %90 : vector<1x32xf32>
    %92 = arith.mulf %83, %65 : vector<1x32xf32>
    %93 = arith.mulf %77, %85 : vector<1x32xf32>
    %94 = arith.addf %92, %93 : vector<1x32xf32>
    %95 = math.tanh %94 : vector<1x32xf32>
    %96 = arith.mulf %91, %95 : vector<1x32xf32>
    %c3_i32 = arith.constant 3 : i32
    %97 = arith.index_cast %c3_i32 : i32 to index
    %c0_26 = arith.constant 0 : index
    %98 = vector.load %arg6[%97, %c0_26] : memref<8x128xf32, #tpu.memory_space<vmem>>, vector<1x128xf32>
    %cst_27 = arith.constant dense<0.000000e+00> : vector<1x128xf32>
    %99 = tpu.matmul %96, %7, %cst_27 {dimension_numbers = #tpu.dot_dimension_numbers<[1], [0], [0], [1], [0, 0, 1, 1], [], []>} : vector<1x32xf32>, vector<32x128xf32>, vector<1x128xf32> -> vector<1x128xf32>
    %100 = arith.addf %98, %99 : vector<1x128xf32>
    %101 = vector.extract_strided_slice %100 {offsets = [0, 0], sizes = [1, 32], strides = [1, 1]} : vector<1x128xf32> to vector<1x32xf32>
    %102 = arith.negf %101 : vector<1x32xf32>
    %103 = math.exp %102 : vector<1x32xf32>
    %cst_28 = arith.constant 1.000000e+00 : f32
    %104 = vector.broadcast %cst_28 : f32 to vector<1x32xf32>
    %105 = arith.addf %104, %103 : vector<1x32xf32>
    %106 = arith.divf %104, %105 : vector<1x32xf32>
    %107 = vector.extract_strided_slice %100 {offsets = [0, 32], sizes = [1, 32], strides = [1, 1]} : vector<1x128xf32> to vector<1x32xf32>
    %108 = arith.negf %107 : vector<1x32xf32>
    %109 = math.exp %108 : vector<1x32xf32>
    %cst_29 = arith.constant 1.000000e+00 : f32
    %110 = vector.broadcast %cst_29 : f32 to vector<1x32xf32>
    %111 = arith.addf %110, %109 : vector<1x32xf32>
    %112 = arith.divf %110, %111 : vector<1x32xf32>
    %113 = vector.extract_strided_slice %100 {offsets = [0, 64], sizes = [1, 32], strides = [1, 1]} : vector<1x128xf32> to vector<1x32xf32>
    %114 = math.tanh %113 : vector<1x32xf32>
    %115 = vector.extract_strided_slice %100 {offsets = [0, 96], sizes = [1, 32], strides = [1, 1]} : vector<1x128xf32> to vector<1x32xf32>
    %116 = arith.negf %115 : vector<1x32xf32>
    %117 = math.exp %116 : vector<1x32xf32>
    %cst_30 = arith.constant 1.000000e+00 : f32
    %118 = vector.broadcast %cst_30 : f32 to vector<1x32xf32>
    %119 = arith.addf %118, %117 : vector<1x32xf32>
    %120 = arith.divf %118, %119 : vector<1x32xf32>
    %121 = arith.mulf %112, %94 : vector<1x32xf32>
    %122 = arith.mulf %106, %114 : vector<1x32xf32>
    %123 = arith.addf %121, %122 : vector<1x32xf32>
    %124 = math.tanh %123 : vector<1x32xf32>
    %125 = arith.mulf %120, %124 : vector<1x32xf32>
    %c4_i32 = arith.constant 4 : i32
    %126 = arith.index_cast %c4_i32 : i32 to index
    %c0_31 = arith.constant 0 : index
    %127 = vector.load %arg6[%126, %c0_31] : memref<8x128xf32, #tpu.memory_space<vmem>>, vector<1x128xf32>
    %cst_32 = arith.constant dense<0.000000e+00> : vector<1x128xf32>
    %128 = tpu.matmul %125, %7, %cst_32 {dimension_numbers = #tpu.dot_dimension_numbers<[1], [0], [0], [1], [0, 0, 1, 1], [], []>} : vector<1x32xf32>, vector<32x128xf32>, vector<1x128xf32> -> vector<1x128xf32>
    %129 = arith.addf %127, %128 : vector<1x128xf32>
    %130 = vector.extract_strided_slice %129 {offsets = [0, 0], sizes = [1, 32], strides = [1, 1]} : vector<1x128xf32> to vector<1x32xf32>
    %131 = arith.negf %130 : vector<1x32xf32>
    %132 = math.exp %131 : vector<1x32xf32>
    %cst_33 = arith.constant 1.000000e+00 : f32
    %133 = vector.broadcast %cst_33 : f32 to vector<1x32xf32>
    %134 = arith.addf %133, %132 : vector<1x32xf32>
    %135 = arith.divf %133, %134 : vector<1x32xf32>
    %136 = vector.extract_strided_slice %129 {offsets = [0, 32], sizes = [1, 32], strides = [1, 1]} : vector<1x128xf32> to vector<1x32xf32>
    %137 = arith.negf %136 : vector<1x32xf32>
    %138 = math.exp %137 : vector<1x32xf32>
    %cst_34 = arith.constant 1.000000e+00 : f32
    %139 = vector.broadcast %cst_34 : f32 to vector<1x32xf32>
    %140 = arith.addf %139, %138 : vector<1x32xf32>
    %141 = arith.divf %139, %140 : vector<1x32xf32>
    %142 = vector.extract_strided_slice %129 {offsets = [0, 64], sizes = [1, 32], strides = [1, 1]} : vector<1x128xf32> to vector<1x32xf32>
    %143 = math.tanh %142 : vector<1x32xf32>
    %144 = vector.extract_strided_slice %129 {offsets = [0, 96], sizes = [1, 32], strides = [1, 1]} : vector<1x128xf32> to vector<1x32xf32>
    %145 = arith.negf %144 : vector<1x32xf32>
    %146 = math.exp %145 : vector<1x32xf32>
    %cst_35 = arith.constant 1.000000e+00 : f32
    %147 = vector.broadcast %cst_35 : f32 to vector<1x32xf32>
    %148 = arith.addf %147, %146 : vector<1x32xf32>
    %149 = arith.divf %147, %148 : vector<1x32xf32>
    %150 = arith.mulf %141, %123 : vector<1x32xf32>
    %151 = arith.mulf %135, %143 : vector<1x32xf32>
    %152 = arith.addf %150, %151 : vector<1x32xf32>
    %153 = math.tanh %152 : vector<1x32xf32>
    %154 = arith.mulf %149, %153 : vector<1x32xf32>
    %c5_i32 = arith.constant 5 : i32
    %155 = arith.index_cast %c5_i32 : i32 to index
    %c0_36 = arith.constant 0 : index
    %156 = vector.load %arg6[%155, %c0_36] : memref<8x128xf32, #tpu.memory_space<vmem>>, vector<1x128xf32>
    %cst_37 = arith.constant dense<0.000000e+00> : vector<1x128xf32>
    %157 = tpu.matmul %154, %7, %cst_37 {dimension_numbers = #tpu.dot_dimension_numbers<[1], [0], [0], [1], [0, 0, 1, 1], [], []>} : vector<1x32xf32>, vector<32x128xf32>, vector<1x128xf32> -> vector<1x128xf32>
    %158 = arith.addf %156, %157 : vector<1x128xf32>
    %159 = vector.extract_strided_slice %158 {offsets = [0, 0], sizes = [1, 32], strides = [1, 1]} : vector<1x128xf32> to vector<1x32xf32>
    %160 = arith.negf %159 : vector<1x32xf32>
    %161 = math.exp %160 : vector<1x32xf32>
    %cst_38 = arith.constant 1.000000e+00 : f32
    %162 = vector.broadcast %cst_38 : f32 to vector<1x32xf32>
    %163 = arith.addf %162, %161 : vector<1x32xf32>
    %164 = arith.divf %162, %163 : vector<1x32xf32>
    %165 = vector.extract_strided_slice %158 {offsets = [0, 32], sizes = [1, 32], strides = [1, 1]} : vector<1x128xf32> to vector<1x32xf32>
    %166 = arith.negf %165 : vector<1x32xf32>
    %167 = math.exp %166 : vector<1x32xf32>
    %cst_39 = arith.constant 1.000000e+00 : f32
    %168 = vector.broadcast %cst_39 : f32 to vector<1x32xf32>
    %169 = arith.addf %168, %167 : vector<1x32xf32>
    %170 = arith.divf %168, %169 : vector<1x32xf32>
    %171 = vector.extract_strided_slice %158 {offsets = [0, 64], sizes = [1, 32], strides = [1, 1]} : vector<1x128xf32> to vector<1x32xf32>
    %172 = math.tanh %171 : vector<1x32xf32>
    %173 = vector.extract_strided_slice %158 {offsets = [0, 96], sizes = [1, 32], strides = [1, 1]} : vector<1x128xf32> to vector<1x32xf32>
    %174 = arith.negf %173 : vector<1x32xf32>
    %175 = math.exp %174 : vector<1x32xf32>
    %cst_40 = arith.constant 1.000000e+00 : f32
    %176 = vector.broadcast %cst_40 : f32 to vector<1x32xf32>
    %177 = arith.addf %176, %175 : vector<1x32xf32>
    %178 = arith.divf %176, %177 : vector<1x32xf32>
    %179 = arith.mulf %170, %152 : vector<1x32xf32>
    %180 = arith.mulf %164, %172 : vector<1x32xf32>
    %181 = arith.addf %179, %180 : vector<1x32xf32>
    %182 = math.tanh %181 : vector<1x32xf32>
    %183 = arith.mulf %178, %182 : vector<1x32xf32>
    %c6_i32 = arith.constant 6 : i32
    %184 = arith.index_cast %c6_i32 : i32 to index
    %c0_41 = arith.constant 0 : index
    %185 = vector.load %arg6[%184, %c0_41] : memref<8x128xf32, #tpu.memory_space<vmem>>, vector<1x128xf32>
    %cst_42 = arith.constant dense<0.000000e+00> : vector<1x128xf32>
    %186 = tpu.matmul %183, %7, %cst_42 {dimension_numbers = #tpu.dot_dimension_numbers<[1], [0], [0], [1], [0, 0, 1, 1], [], []>} : vector<1x32xf32>, vector<32x128xf32>, vector<1x128xf32> -> vector<1x128xf32>
    %187 = arith.addf %185, %186 : vector<1x128xf32>
    %188 = vector.extract_strided_slice %187 {offsets = [0, 0], sizes = [1, 32], strides = [1, 1]} : vector<1x128xf32> to vector<1x32xf32>
    %189 = arith.negf %188 : vector<1x32xf32>
    %190 = math.exp %189 : vector<1x32xf32>
    %cst_43 = arith.constant 1.000000e+00 : f32
    %191 = vector.broadcast %cst_43 : f32 to vector<1x32xf32>
    %192 = arith.addf %191, %190 : vector<1x32xf32>
    %193 = arith.divf %191, %192 : vector<1x32xf32>
    %194 = vector.extract_strided_slice %187 {offsets = [0, 32], sizes = [1, 32], strides = [1, 1]} : vector<1x128xf32> to vector<1x32xf32>
    %195 = arith.negf %194 : vector<1x32xf32>
    %196 = math.exp %195 : vector<1x32xf32>
    %cst_44 = arith.constant 1.000000e+00 : f32
    %197 = vector.broadcast %cst_44 : f32 to vector<1x32xf32>
    %198 = arith.addf %197, %196 : vector<1x32xf32>
    %199 = arith.divf %197, %198 : vector<1x32xf32>
    %200 = vector.extract_strided_slice %187 {offsets = [0, 64], sizes = [1, 32], strides = [1, 1]} : vector<1x128xf32> to vector<1x32xf32>
    %201 = math.tanh %200 : vector<1x32xf32>
    %202 = vector.extract_strided_slice %187 {offsets = [0, 96], sizes = [1, 32], strides = [1, 1]} : vector<1x128xf32> to vector<1x32xf32>
    %203 = arith.negf %202 : vector<1x32xf32>
    %204 = math.exp %203 : vector<1x32xf32>
    %cst_45 = arith.constant 1.000000e+00 : f32
    %205 = vector.broadcast %cst_45 : f32 to vector<1x32xf32>
    %206 = arith.addf %205, %204 : vector<1x32xf32>
    %207 = arith.divf %205, %206 : vector<1x32xf32>
    %208 = arith.mulf %199, %181 : vector<1x32xf32>
    %209 = arith.mulf %193, %201 : vector<1x32xf32>
    %210 = arith.addf %208, %209 : vector<1x32xf32>
    %211 = math.tanh %210 : vector<1x32xf32>
    %212 = arith.mulf %207, %211 : vector<1x32xf32>
    %c7_i32 = arith.constant 7 : i32
    %213 = arith.index_cast %c7_i32 : i32 to index
    %c0_46 = arith.constant 0 : index
    %214 = vector.load %arg6[%213, %c0_46] : memref<8x128xf32, #tpu.memory_space<vmem>>, vector<1x128xf32>
    %cst_47 = arith.constant dense<0.000000e+00> : vector<1x128xf32>
    %215 = tpu.matmul %212, %7, %cst_47 {dimension_numbers = #tpu.dot_dimension_numbers<[1], [0], [0], [1], [0, 0, 1, 1], [], []>} : vector<1x32xf32>, vector<32x128xf32>, vector<1x128xf32> -> vector<1x128xf32>
    %216 = arith.addf %214, %215 : vector<1x128xf32>
    %217 = vector.extract_strided_slice %216 {offsets = [0, 0], sizes = [1, 32], strides = [1, 1]} : vector<1x128xf32> to vector<1x32xf32>
    %218 = arith.negf %217 : vector<1x32xf32>
    %219 = math.exp %218 : vector<1x32xf32>
    %cst_48 = arith.constant 1.000000e+00 : f32
    %220 = vector.broadcast %cst_48 : f32 to vector<1x32xf32>
    %221 = arith.addf %220, %219 : vector<1x32xf32>
    %222 = arith.divf %220, %221 : vector<1x32xf32>
    %223 = vector.extract_strided_slice %216 {offsets = [0, 32], sizes = [1, 32], strides = [1, 1]} : vector<1x128xf32> to vector<1x32xf32>
    %224 = arith.negf %223 : vector<1x32xf32>
    %225 = math.exp %224 : vector<1x32xf32>
    %cst_49 = arith.constant 1.000000e+00 : f32
    %226 = vector.broadcast %cst_49 : f32 to vector<1x32xf32>
    %227 = arith.addf %226, %225 : vector<1x32xf32>
    %228 = arith.divf %226, %227 : vector<1x32xf32>
    %229 = vector.extract_strided_slice %216 {offsets = [0, 64], sizes = [1, 32], strides = [1, 1]} : vector<1x128xf32> to vector<1x32xf32>
    %230 = math.tanh %229 : vector<1x32xf32>
    %231 = vector.extract_strided_slice %216 {offsets = [0, 96], sizes = [1, 32], strides = [1, 1]} : vector<1x128xf32> to vector<1x32xf32>
    %232 = arith.negf %231 : vector<1x32xf32>
    %233 = math.exp %232 : vector<1x32xf32>
    %cst_50 = arith.constant 1.000000e+00 : f32
    %234 = vector.broadcast %cst_50 : f32 to vector<1x32xf32>
    %235 = arith.addf %234, %233 : vector<1x32xf32>
    %236 = arith.divf %234, %235 : vector<1x32xf32>
    %237 = arith.mulf %228, %210 : vector<1x32xf32>
    %238 = arith.mulf %222, %230 : vector<1x32xf32>
    %239 = arith.addf %237, %238 : vector<1x32xf32>
    %240 = math.tanh %239 : vector<1x32xf32>
    %241 = arith.mulf %236, %240 : vector<1x32xf32>
    %c8_i32 = arith.constant 8 : i32
    %c0_51 = arith.constant 0 : index
    %c0_52 = arith.constant 0 : index
    %242 = vector.load %arg4[%c0_51, %c0_52] : memref<1x32xf32, #tpu.memory_space<vmem>>, vector<1x32xf32>
    tpu.vector_store %arg4[%c0_51, %c0_52], %241 {strides = array<i32>} : memref<1x32xf32, #tpu.memory_space<vmem>>, vector<1x32xf32>,
    %c0_53 = arith.constant 0 : index
    %c0_54 = arith.constant 0 : index
    %243 = vector.load %arg5[%c0_53, %c0_54] : memref<1x32xf32, #tpu.memory_space<vmem>>, vector<1x32xf32>
    tpu.vector_store %arg5[%c0_53, %c0_54], %239 {strides = array<i32>} : memref<1x32xf32, #tpu.memory_space<vmem>>, vector<1x32xf32>,
    return
  }
}

</mosaic_0001>

<llo_original>
// kernel: lstm_encoder_forward.1
$region0: #{lstm_encoder_forward.1}
  #allocation0 [shape = 'u32[]', space=smem, size = 0x4, offset = 0x4, fixed_abs, tag = 'smem constant byte address 0x4 - core index']
  #allocation1 [shape = 'u32[144,128]{1,0:T(1,128)}', space=vmem, size = 0x12000, scoped, tag = 'internal scratch']
  #allocation2 [shape = 'f32[8,128]{1,0:T(8,128)}', space=vmem, size = 0x1000, scoped, tag = 'scratch operand']
  %s0 = inlined_call_operand.vmem [shape: f32[8,32], index: 0, kind: input, shape index: {}]
  %s1 = inlined_call_operand.vmem [shape: f32[32,128], index: 1, kind: input, shape index: {}]
  %s2 = inlined_call_operand.vmem [shape: f32[32,128], index: 2, kind: input, shape index: {}]
  %s3 = inlined_call_operand.vmem [shape: f32[1,128], index: 3, kind: input, shape index: {}]
  %s4 = inlined_call_operand.hbm [shape: f32[1,32], index: 4, kind: output, shape index: {0}]
  %s5 = inlined_call_operand.hbm [shape: f32[1,32], index: 5, kind: output, shape index: {1}]
  %6 = xla_tuple %s4, %s5
  %s7 = sld [smem:[#allocation0]]
  $region34: #{lstm_encoder_forward.1} parent=0
    _
  %s9 = ssub.s32 1, %s7
  %s10 = scalar_select 0, %s9, %s7
  $region1: #{lstm_encoder_forward.1} parent=0
    #allocation3 [shape = 'u8[512]{0}', space=vmem, size = 0x400, scoped, tag = 'output window, operand 0, single buffered']
    #allocation4 [shape = 's32[1]{0}', space=sflag, size = 0x4, scoped, tag = 'scoped memory for lstm_encoder_forward.1']
    #allocation5 [shape = 'u8[512]{0}', space=vmem, size = 0x400, scoped, tag = 'output window, operand 1, single buffered']
    #allocation6 [shape = 's32[1]{0}', space=sflag, size = 0x4, scoped, tag = 'scoped memory for lstm_encoder_forward.1']
    %11 = vsyncpa [#allocation4], 0
    %12 = vsyncpa [#allocation6], 0
    // Predicated region
    $region2: #{lstm_encoder_forward.1} parent=1 // pred_check
      _
    $region3: #{lstm_encoder_forward.1} parent=1 // pred_check_branch
      %14 = sbr.rel (0) target = $region5
    $region4: #{lstm_encoder_forward.1} parent=1 // pred_region
      _
    $region5: #{lstm_encoder_forward.1} parent=1 // pred_fallthru
      _
    // Predicated region
    $region6: #{lstm_encoder_forward.1} parent=1 // pred_check
      _
    $region7: #{lstm_encoder_forward.1} parent=1 // pred_check_branch
      %16 = sbr.rel (0) target = $region9
    $region8: #{lstm_encoder_forward.1} parent=1 // pred_region
      _
    $region9: #{lstm_encoder_forward.1} parent=1 // pred_fallthru
      _
    // Predicated region
    $region10: #{lstm_encoder_forward.1} parent=1 // pred_check
      _
    $region11: #{lstm_encoder_forward.1} parent=1 // pred_check_branch
      %18 = sbr.rel (0) target = $region13
    $region12: #{lstm_encoder_forward.1} parent=1 // pred_region
      _
    $region13: #{lstm_encoder_forward.1} parent=1 // pred_fallthru
      _
    // Predicated region
    $region14: #{lstm_encoder_forward.1} parent=1 // pred_check
      _
    $region15: #{lstm_encoder_forward.1} parent=1 // pred_check_branch
      %20 = sbr.rel (0) target = $region17
    $region16: #{lstm_encoder_forward.1} parent=1 // pred_region
      _
    $region17: #{lstm_encoder_forward.1} parent=1 // pred_fallthru
      _
    %v21 = vld [vmem:[%s0] sm:$0xff]
    %v22 = vld [vmem:[%s1] sm:$0xff]
    %v23 = vld [vmem:[%s1 + $0x8] sm:$0xff]
    %v24 = vld [vmem:[%s1 + $0x10] sm:$0xff]
    %v25 = vld [vmem:[%s1 + $0x18] sm:$0xff]
    %v26 = vld [vmem:[%s3] sm:$0x1]
    %v28 = vlaneseq
    %v29 = vshrl.u32 %v28, 7
    %v30 = vsub.s32 0, %v29
    %v31 = vrot.slane %v26, %v30
    %vm33 = vcmask 261120
    %v35 = vsel %vm33, %v21, 0
    %37 = vmatprep.subr.mxu0 0.0
    %38 = vmatpush1.msra.mxu0 %v22
    %39 = vmatprep.subr.mxu0 0.0
    %40 = vmatpush1.msra.mxu0 %v23
    %41 = vmatprep.subr.mxu0 0.0
    %42 = vmatpush1.msra.mxu0 %v24
    %43 = vmatprep.subr.mxu0 0.0
    %44 = vmatpush1.msra.mxu0 %v25
    %45 = vmatprep.subr.mxu0 0.0
    %46 = vmatpush1.msra.mxu0 0.0
    %47 = vmatprep.subr.mxu0 0.0
    %48 = vmatpush1.msra.mxu0 0.0
    %49 = vmatprep.subr.mxu0 0.0
    %50 = vmatpush1.msra.mxu0 0.0
    %51 = vmatprep.subr.mxu0 0.0
    %52 = vmatpush1.msra.mxu0 0.0
    %53 = vmatprep.subr.mxu0 0.0
    %54 = vmatpush1.msra.mxu0 0.0
    %55 = vmatprep.subr.mxu0 0.0
    %56 = vmatpush1.msra.mxu0 0.0
    %57 = vmatprep.subr.mxu0 0.0
    %58 = vmatpush1.msra.mxu0 0.0
    %59 = vmatprep.subr.mxu0 0.0
    %60 = vmatpush1.msra.mxu0 0.0
    %61 = vmatprep.subr.mxu0 0.0
    %62 = vmatpush1.msra.mxu0 0.0
    %63 = vmatprep.subr.mxu0 0.0
    %64 = vmatpush1.msra.mxu0 0.0
    %65 = vmatprep.subr.mxu0 0.0
    %66 = vmatpush1.msra.mxu0 0.0
    %67 = vmatprep.subr.mxu0 0.0
    %68 = vmatpush1.msra.mxu0 0.0
    %69 = vmatprep.subr.mxu0 0.0
    %70 = vmatpush1.msra.mxu0 0.0
    %71 = vmatprep.subr.mxu0 0.0
    %72 = vmatpush1.msra.mxu0 0.0
    %73 = vmatprep.subr.mxu0 0.0
    %74 = vmatpush1.msra.mxu0 0.0
    %75 = vmatprep.subr.mxu0 0.0
    %76 = vmatpush1.msra.mxu0 0.0
    %77 = vmatprep.subr.mxu0 0.0
    %78 = vmatpush1.msra.mxu0 0.0
    %79 = vmatprep.subr.mxu0 0.0
    %80 = vmatpush1.msra.mxu0 0.0
    %81 = vmatprep.subr.mxu0 0.0
    %82 = vmatpush1.msra.mxu0 0.0
    %83 = vmatprep.subr.mxu0 0.0
    %84 = vmatpush1.msra.mxu0 0.0
    %85 = vmatprep.subr.mxu0 0.0
    %86 = vmatpush1.msra.mxu0 0.0
    %87 = vmatprep.subr.mxu0 0.0
    %88 = vmatpush1.msra.mxu0 0.0
    %89 = vmatprep.subr.mxu0 0.0
    %90 = vmatpush1.msra.mxu0 0.0
    %91 = vmatprep.subr.mxu0 0.0
    %92 = vmatpush1.msra.mxu0 0.0
    %93 = vmatprep.subr.mxu0 0.0
    %94 = vmatpush1.msra.mxu0 0.0
    %95 = vmatprep.subr.mxu0 0.0
    %96 = vmatpush1.msra.mxu0 0.0
    %97 = vmatprep.subr.mxu0 0.0
    %98 = vmatpush1.msra.mxu0 0.0
    %99 = vmatprep.subr.mxu0 0.0
    %100 = vmatpush1.msra.mxu0 0.0
    %101 = vmatprep.mubr.f32.mxu0 0.0
    %102 = vmatmul.mubr.f32.gmra.mrb[0].mxu0 %v35
    %v103 = vpop.f32.mrb[0].mxu0
    %v104 = vadd.f32 %v31, %v103
    %v105 = vpop.f32.mrb[0].mxu0
    %106 = vdwg.mxu0
    %107 = vst [vmem:[#allocation2] sm:$0xff] %v104
    %v108 = vld [vmem:[%s2] sm:$0xff]
    %v109 = vld [vmem:[%s2 + $0x8] sm:$0xff]
    %v110 = vld [vmem:[%s2 + $0x10] sm:$0xff]
    %v111 = vld [vmem:[%s2 + $0x18] sm:$0xff]
    %v112 = vld [vmem:[#allocation2] sm:$0x1]
    %v114 = vsel %vm33, 0.0, 0
    %116 = vmatprep.subr.mxu0 0.0
    %117 = vmatpush1.msra.mxu0 %v108
    %118 = vmatprep.subr.mxu0 0.0
    %119 = vmatpush1.msra.mxu0 %v109
    %120 = vmatprep.subr.mxu0 0.0
    %121 = vmatpush1.msra.mxu0 %v110
    %122 = vmatprep.subr.mxu0 0.0
    %123 = vmatpush1.msra.mxu0 %v111
    %124 = vmatprep.subr.mxu0 0.0
    %125 = vmatpush1.msra.mxu0 0.0
    %126 = vmatprep.subr.mxu0 0.0
    %127 = vmatpush1.msra.mxu0 0.0
    %128 = vmatprep.subr.mxu0 0.0
    %129 = vmatpush1.msra.mxu0 0.0
    %130 = vmatprep.subr.mxu0 0.0
    %131 = vmatpush1.msra.mxu0 0.0
    %132 = vmatprep.subr.mxu0 0.0
    %133 = vmatpush1.msra.mxu0 0.0
    %134 = vmatprep.subr.mxu0 0.0
    %135 = vmatpush1.msra.mxu0 0.0
    %136 = vmatprep.subr.mxu0 0.0
    %137 = vmatpush1.msra.mxu0 0.0
    %138 = vmatprep.subr.mxu0 0.0
    %139 = vmatpush1.msra.mxu0 0.0
    %140 = vmatprep.subr.mxu0 0.0
    %141 = vmatpush1.msra.mxu0 0.0
    %142 = vmatprep.subr.mxu0 0.0
    %143 = vmatpush1.msra.mxu0 0.0
    %144 = vmatprep.subr.mxu0 0.0
    %145 = vmatpush1.msra.mxu0 0.0
    %146 = vmatprep.subr.mxu0 0.0
    %147 = vmatpush1.msra.mxu0 0.0
    %148 = vmatprep.subr.mxu0 0.0
    %149 = vmatpush1.msra.mxu0 0.0
    %150 = vmatprep.subr.mxu0 0.0
    %151 = vmatpush1.msra.mxu0 0.0
    %152 = vmatprep.subr.mxu0 0.0
    %153 = vmatpush1.msra.mxu0 0.0
    %154 = vmatprep.subr.mxu0 0.0
    %155 = vmatpush1.msra.mxu0 0.0
    %156 = vmatprep.subr.mxu0 0.0
    %157 = vmatpush1.msra.mxu0 0.0
    %158 = vmatprep.subr.mxu0 0.0
    %159 = vmatpush1.msra.mxu0 0.0
    %160 = vmatprep.subr.mxu0 0.0
    %161 = vmatpush1.msra.mxu0 0.0
    %162 = vmatprep.subr.mxu0 0.0
    %163 = vmatpush1.msra.mxu0 0.0
    %164 = vmatprep.subr.mxu0 0.0
    %165 = vmatpush1.msra.mxu0 0.0
    %166 = vmatprep.subr.mxu0 0.0
    %167 = vmatpush1.msra.mxu0 0.0
    %168 = vmatprep.subr.mxu0 0.0
    %169 = vmatpush1.msra.mxu0 0.0
    %170 = vmatprep.subr.mxu0 0.0
    %171 = vmatpush1.msra.mxu0 0.0
    %172 = vmatprep.subr.mxu0 0.0
    %173 = vmatpush1.msra.mxu0 0.0
    %174 = vmatprep.subr.mxu0 0.0
    %175 = vmatpush1.msra.mxu0 0.0
    %176 = vmatprep.subr.mxu0 0.0
    %177 = vmatpush1.msra.mxu0 0.0
    %178 = vmatprep.subr.mxu0 0.0
    %179 = vmatpush1.msra.mxu0 0.0
    %180 = vmatprep.mubr.f32.mxu0 0.0
    %181 = vmatmul.mubr.f32.gmra.mrb[0].mxu0 %v114
    %v182 = vpop.f32.mrb[0].mxu0
    %v183 = vadd.f32 0.0, %v182
    %v184 = vpop.f32.mrb[0].mxu0
    %185 = vdwg.mxu0
    %v186 = vadd.f32 %v112, %v183
    %v187 = vxor.u32 %v186, 2147483648
    %v188 = vmul.f32 %v187, 1.442695
    %v189 = vpow.pop %v188
    %v190 = vadd.f32 %v189, 1.0
    %v191 = vrcp.pop %v190
    %v192 = vmul.f32 1.0, %v191
    %v193 = vtanh.pop %v186
    %v194 = vmul.f32 %v192, 0.0
    %196 = vrot.lane.b32.xlu0 %v193, 64
    %v197 = vpop.permute.xlu0 %196
    %v199 = vmul.f32 %v192, %v197
    %201 = vrot.lane.b32.xlu0 %v199, 32
    %v202 = vpop.permute.xlu0 %201
    %v204 = vadd.f32 %v194, %v202
    %v205 = vtanh.pop %v204
    %207 = vrot.lane.b32.xlu0 %v205, 64
    %v208 = vpop.permute.xlu0 %207
    %v210 = vmul.f32 %v192, %v208
    %v211 = vld [vmem:[#allocation2 + $0x1] sm:$0x1]
    %213 = vrot.lane.b32.xlu0 %v210, 32
    %v214 = vpop.permute.xlu0 %213
    %v215 = vsel %vm33, %v214, 0
    %217 = vmatprep.subr.mxu0 0.0
    %218 = vmatpush1.msra.mxu0 %v108
    %219 = vmatprep.subr.mxu0 0.0
    %220 = vmatpush1.msra.mxu0 %v109
    %221 = vmatprep.subr.mxu0 0.0
    %222 = vmatpush1.msra.mxu0 %v110
    %223 = vmatprep.subr.mxu0 0.0
    %224 = vmatpush1.msra.mxu0 %v111
    %225 = vmatprep.subr.mxu0 0.0
    %226 = vmatpush1.msra.mxu0 0.0
    %227 = vmatprep.subr.mxu0 0.0
    %228 = vmatpush1.msra.mxu0 0.0
    %229 = vmatprep.subr.mxu0 0.0
    %230 = vmatpush1.msra.mxu0 0.0
    %231 = vmatprep.subr.mxu0 0.0
    %232 = vmatpush1.msra.mxu0 0.0
    %233 = vmatprep.subr.mxu0 0.0
    %234 = vmatpush1.msra.mxu0 0.0
    %235 = vmatprep.subr.mxu0 0.0
    %236 = vmatpush1.msra.mxu0 0.0
    %237 = vmatprep.subr.mxu0 0.0
    %238 = vmatpush1.msra.mxu0 0.0
    %239 = vmatprep.subr.mxu0 0.0
    %240 = vmatpush1.msra.mxu0 0.0
    %241 = vmatprep.subr.mxu0 0.0
    %242 = vmatpush1.msra.mxu0 0.0
    %243 = vmatprep.subr.mxu0 0.0
    %244 = vmatpush1.msra.mxu0 0.0
    %245 = vmatprep.subr.mxu0 0.0
    %246 = vmatpush1.msra.mxu0 0.0
    %247 = vmatprep.subr.mxu0 0.0
    %248 = vmatpush1.msra.mxu0 0.0
    %249 = vmatprep.subr.mxu0 0.0
    %250 = vmatpush1.msra.mxu0 0.0
    %251 = vmatprep.subr.mxu0 0.0
    %252 = vmatpush1.msra.mxu0 0.0
    %253 = vmatprep.subr.mxu0 0.0
    %254 = vmatpush1.msra.mxu0 0.0
    %255 = vmatprep.subr.mxu0 0.0
    %256 = vmatpush1.msra.mxu0 0.0
    %257 = vmatprep.subr.mxu0 0.0
    %258 = vmatpush1.msra.mxu0 0.0
    %259 = vmatprep.subr.mxu0 0.0
    %260 = vmatpush1.msra.mxu0 0.0
    %261 = vmatprep.subr.mxu0 0.0
    %262 = vmatpush1.msra.mxu0 0.0
    %263 = vmatprep.subr.mxu0 0.0
    %264 = vmatpush1.msra.mxu0 0.0
    %265 = vmatprep.subr.mxu0 0.0
    %266 = vmatpush1.msra.mxu0 0.0
    %267 = vmatprep.subr.mxu0 0.0
    %268 = vmatpush1.msra.mxu0 0.0
    %269 = vmatprep.subr.mxu0 0.0
    %270 = vmatpush1.msra.mxu0 0.0
    %271 = vmatprep.subr.mxu0 0.0
    %272 = vmatpush1.msra.mxu0 0.0
    %273 = vmatprep.subr.mxu0 0.0
    %274 = vmatpush1.msra.mxu0 0.0
    %275 = vmatprep.subr.mxu0 0.0
    %276 = vmatpush1.msra.mxu0 0.0
    %277 = vmatprep.subr.mxu0 0.0
    %278 = vmatpush1.msra.mxu0 0.0
    %279 = vmatprep.subr.mxu0 0.0
    %280 = vmatpush1.msra.mxu0 0.0
    %281 = vmatprep.mubr.f32.mxu0 0.0
    %282 = vmatmul.mubr.f32.gmra.mrb[0].mxu0 %v215
    %v283 = vpop.f32.mrb[0].mxu0
    %v284 = vadd.f32 0.0, %v283
    %v285 = vpop.f32.mrb[0].mxu0
    %286 = vdwg.mxu0
    %v287 = vadd.f32 %v211, %v284
    %v288 = vxor.u32 %v287, 2147483648
    %v289 = vmul.f32 %v288, 1.442695
    %v290 = vpow.pop %v289
    %v291 = vadd.f32 %v290, 1.0
    %v292 = vrcp.pop %v291
    %v293 = vmul.f32 1.0, %v292
    %v294 = vtanh.pop %v287
    %v295 = vmul.f32 %v293, %v204
    %297 = vrot.lane.b32.xlu0 %v294, 64
    %v298 = vpop.permute.xlu0 %297
    %v300 = vmul.f32 %v293, %v298
    %302 = vrot.lane.b32.xlu0 %v300, 32
    %v303 = vpop.permute.xlu0 %302
    %v305 = vadd.f32 %v295, %v303
    %v306 = vtanh.pop %v305
    %308 = vrot.lane.b32.xlu0 %v306, 64
    %v309 = vpop.permute.xlu0 %308
    %v311 = vmul.f32 %v293, %v309
    %v312 = vld [vmem:[#allocation2 + $0x2] sm:$0x1]
    %314 = vrot.lane.b32.xlu0 %v311, 32
    %v315 = vpop.permute.xlu0 %314
    %v316 = vsel %vm33, %v315, 0
    %318 = vmatprep.subr.mxu0 0.0
    %319 = vmatpush1.msra.mxu0 %v108
    %320 = vmatprep.subr.mxu0 0.0
    %321 = vmatpush1.msra.mxu0 %v109
    %322 = vmatprep.subr.mxu0 0.0
    %323 = vmatpush1.msra.mxu0 %v110
    %324 = vmatprep.subr.mxu0 0.0
    %325 = vmatpush1.msra.mxu0 %v111
    %326 = vmatprep.subr.mxu0 0.0
    %327 = vmatpush1.msra.mxu0 0.0
    %328 = vmatprep.subr.mxu0 0.0
    %329 = vmatpush1.msra.mxu0 0.0
    %330 = vmatprep.subr.mxu0 0.0
    %331 = vmatpush1.msra.mxu0 0.0
    %332 = vmatprep.subr.mxu0 0.0
    %333 = vmatpush1.msra.mxu0 0.0
    %334 = vmatprep.subr.mxu0 0.0
    %335 = vmatpush1.msra.mxu0 0.0
    %336 = vmatprep.subr.mxu0 0.0
    %337 = vmatpush1.msra.mxu0 0.0
    %338 = vmatprep.subr.mxu0 0.0
    %339 = vmatpush1.msra.mxu0 0.0
    %340 = vmatprep.subr.mxu0 0.0
    %341 = vmatpush1.msra.mxu0 0.0
    %342 = vmatprep.subr.mxu0 0.0
    %343 = vmatpush1.msra.mxu0 0.0
    %344 = vmatprep.subr.mxu0 0.0
    %345 = vmatpush1.msra.mxu0 0.0
    %346 = vmatprep.subr.mxu0 0.0
    %347 = vmatpush1.msra.mxu0 0.0
    %348 = vmatprep.subr.mxu0 0.0
    %349 = vmatpush1.msra.mxu0 0.0
    %350 = vmatprep.subr.mxu0 0.0
    %351 = vmatpush1.msra.mxu0 0.0
    %352 = vmatprep.subr.mxu0 0.0
    %353 = vmatpush1.msra.mxu0 0.0
    %354 = vmatprep.subr.mxu0 0.0
    %355 = vmatpush1.msra.mxu0 0.0
    %356 = vmatprep.subr.mxu0 0.0
    %357 = vmatpush1.msra.mxu0 0.0
    %358 = vmatprep.subr.mxu0 0.0
    %359 = vmatpush1.msra.mxu0 0.0
    %360 = vmatprep.subr.mxu0 0.0
    %361 = vmatpush1.msra.mxu0 0.0
    %362 = vmatprep.subr.mxu0 0.0
    %363 = vmatpush1.msra.mxu0 0.0
    %364 = vmatprep.subr.mxu0 0.0
    %365 = vmatpush1.msra.mxu0 0.0
    %366 = vmatprep.subr.mxu0 0.0
    %367 = vmatpush1.msra.mxu0 0.0
    %368 = vmatprep.subr.mxu0 0.0
    %369 = vmatpush1.msra.mxu0 0.0
    %370 = vmatprep.subr.mxu0 0.0
    %371 = vmatpush1.msra.mxu0 0.0
    %372 = vmatprep.subr.mxu0 0.0
    %373 = vmatpush1.msra.mxu0 0.0
    %374 = vmatprep.subr.mxu0 0.0
    %375 = vmatpush1.msra.mxu0 0.0
    %376 = vmatprep.subr.mxu0 0.0
    %377 = vmatpush1.msra.mxu0 0.0
    %378 = vmatprep.subr.mxu0 0.0
    %379 = vmatpush1.msra.mxu0 0.0
    %380 = vmatprep.subr.mxu0 0.0
    %381 = vmatpush1.msra.mxu0 0.0
    %382 = vmatprep.mubr.f32.mxu0 0.0
    %383 = vmatmul.mubr.f32.gmra.mrb[0].mxu0 %v316
    %v384 = vpop.f32.mrb[0].mxu0
    %v385 = vadd.f32 0.0, %v384
    %v386 = vpop.f32.mrb[0].mxu0
    %387 = vdwg.mxu0
    %v388 = vadd.f32 %v312, %v385
    %v389 = vxor.u32 %v388, 2147483648
    %v390 = vmul.f32 %v389, 1.442695
    %v391 = vpow.pop %v390
    %v392 = vadd.f32 %v391, 1.0
    %v393 = vrcp.pop %v392
    %v394 = vmul.f32 1.0, %v393
    %v395 = vtanh.pop %v388
    %v396 = vmul.f32 %v394, %v305
    %398 = vrot.lane.b32.xlu0 %v395, 64
    %v399 = vpop.permute.xlu0 %398
    %v401 = vmul.f32 %v394, %v399
    %403 = vrot.lane.b32.xlu0 %v401, 32
    %v404 = vpop.permute.xlu0 %403
    %v406 = vadd.f32 %v396, %v404
    %v407 = vtanh.pop %v406
    %409 = vrot.lane.b32.xlu0 %v407, 64
    %v410 = vpop.permute.xlu0 %409
    %v412 = vmul.f32 %v394, %v410
    %v413 = vld [vmem:[#allocation2 + $0x3] sm:$0x1]
    %415 = vrot.lane.b32.xlu0 %v412, 32
    %v416 = vpop.permute.xlu0 %415
    %v417 = vsel %vm33, %v416, 0
    %419 = vmatprep.subr.mxu0 0.0
    %420 = vmatpush1.msra.mxu0 %v108
    %421 = vmatprep.subr.mxu0 0.0
    %422 = vmatpush1.msra.mxu0 %v109
    %423 = vmatprep.subr.mxu0 0.0
    %424 = vmatpush1.msra.mxu0 %v110
    %425 = vmatprep.subr.mxu0 0.0
    %426 = vmatpush1.msra.mxu0 %v111
    %427 = vmatprep.subr.mxu0 0.0
    %428 = vmatpush1.msra.mxu0 0.0
    %429 = vmatprep.subr.mxu0 0.0
    %430 = vmatpush1.msra.mxu0 0.0
    %431 = vmatprep.subr.mxu0 0.0
    %432 = vmatpush1.msra.mxu0 0.0
    %433 = vmatprep.subr.mxu0 0.0
    %434 = vmatpush1.msra.mxu0 0.0
    %435 = vmatprep.subr.mxu0 0.0
    %436 = vmatpush1.msra.mxu0 0.0
    %437 = vmatprep.subr.mxu0 0.0
    %438 = vmatpush1.msra.mxu0 0.0
    %439 = vmatprep.subr.mxu0 0.0
    %440 = vmatpush1.msra.mxu0 0.0
    %441 = vmatprep.subr.mxu0 0.0
    %442 = vmatpush1.msra.mxu0 0.0
    %443 = vmatprep.subr.mxu0 0.0
    %444 = vmatpush1.msra.mxu0 0.0
    %445 = vmatprep.subr.mxu0 0.0
    %446 = vmatpush1.msra.mxu0 0.0
    %447 = vmatprep.subr.mxu0 0.0
    %448 = vmatpush1.msra.mxu0 0.0
    %449 = vmatprep.subr.mxu0 0.0
    %450 = vmatpush1.msra.mxu0 0.0
    %451 = vmatprep.subr.mxu0 0.0
    %452 = vmatpush1.msra.mxu0 0.0
    %453 = vmatprep.subr.mxu0 0.0
    %454 = vmatpush1.msra.mxu0 0.0
    %455 = vmatprep.subr.mxu0 0.0
    %456 = vmatpush1.msra.mxu0 0.0
    %457 = vmatprep.subr.mxu0 0.0
    %458 = vmatpush1.msra.mxu0 0.0
    %459 = vmatprep.subr.mxu0 0.0
    %460 = vmatpush1.msra.mxu0 0.0
    %461 = vmatprep.subr.mxu0 0.0
    %462 = vmatpush1.msra.mxu0 0.0
    %463 = vmatprep.subr.mxu0 0.0
    %464 = vmatpush1.msra.mxu0 0.0
    %465 = vmatprep.subr.mxu0 0.0
    %466 = vmatpush1.msra.mxu0 0.0
    %467 = vmatprep.subr.mxu0 0.0
    %468 = vmatpush1.msra.mxu0 0.0
    %469 = vmatprep.subr.mxu0 0.0
    %470 = vmatpush1.msra.mxu0 0.0
    %471 = vmatprep.subr.mxu0 0.0
    %472 = vmatpush1.msra.mxu0 0.0
    %473 = vmatprep.subr.mxu0 0.0
    %474 = vmatpush1.msra.mxu0 0.0
    %475 = vmatprep.subr.mxu0 0.0
    %476 = vmatpush1.msra.mxu0 0.0
    %477 = vmatprep.subr.mxu0 0.0
    %478 = vmatpush1.msra.mxu0 0.0
    %479 = vmatprep.subr.mxu0 0.0
    %480 = vmatpush1.msra.mxu0 0.0
    %481 = vmatprep.subr.mxu0 0.0
    %482 = vmatpush1.msra.mxu0 0.0
    %483 = vmatprep.mubr.f32.mxu0 0.0
    %484 = vmatmul.mubr.f32.gmra.mrb[0].mxu0 %v417
    %v485 = vpop.f32.mrb[0].mxu0
    %v486 = vadd.f32 0.0, %v485
    %v487 = vpop.f32.mrb[0].mxu0
    %488 = vdwg.mxu0
    %v489 = vadd.f32 %v413, %v486
    %v490 = vxor.u32 %v489, 2147483648
    %v491 = vmul.f32 %v490, 1.442695
    %v492 = vpow.pop %v491
    %v493 = vadd.f32 %v492, 1.0
    %v494 = vrcp.pop %v493
    %v495 = vmul.f32 1.0, %v494
    %v496 = vtanh.pop %v489
    %v497 = vmul.f32 %v495, %v406
    %499 = vrot.lane.b32.xlu0 %v496, 64
    %v500 = vpop.permute.xlu0 %499
    %v502 = vmul.f32 %v495, %v500
    %504 = vrot.lane.b32.xlu0 %v502, 32
    %v505 = vpop.permute.xlu0 %504
    %v507 = vadd.f32 %v497, %v505
    %v508 = vtanh.pop %v507
    %510 = vrot.lane.b32.xlu0 %v508, 64
    %v511 = vpop.permute.xlu0 %510
    %v513 = vmul.f32 %v495, %v511
    %v514 = vld [vmem:[#allocation2 + $0x4] sm:$0x1]
    %516 = vrot.lane.b32.xlu0 %v513, 32
    %v517 = vpop.permute.xlu0 %516
    %v518 = vsel %vm33, %v517, 0
    %520 = vmatprep.subr.mxu0 0.0
    %521 = vmatpush1.msra.mxu0 %v108
    %522 = vmatprep.subr.mxu0 0.0
    %523 = vmatpush1.msra.mxu0 %v109
    %524 = vmatprep.subr.mxu0 0.0
    %525 = vmatpush1.msra.mxu0 %v110
    %526 = vmatprep.subr.mxu0 0.0
    %527 = vmatpush1.msra.mxu0 %v111
    %528 = vmatprep.subr.mxu0 0.0
    %529 = vmatpush1.msra.mxu0 0.0
    %530 = vmatprep.subr.mxu0 0.0
    %531 = vmatpush1.msra.mxu0 0.0
    %532 = vmatprep.subr.mxu0 0.0
    %533 = vmatpush1.msra.mxu0 0.0
    %534 = vmatprep.subr.mxu0 0.0
    %535 = vmatpush1.msra.mxu0 0.0
    %536 = vmatprep.subr.mxu0 0.0
    %537 = vmatpush1.msra.mxu0 0.0
    %538 = vmatprep.subr.mxu0 0.0
    %539 = vmatpush1.msra.mxu0 0.0
    %540 = vmatprep.subr.mxu0 0.0
    %541 = vmatpush1.msra.mxu0 0.0
    %542 = vmatprep.subr.mxu0 0.0
    %543 = vmatpush1.msra.mxu0 0.0
    %544 = vmatprep.subr.mxu0 0.0
    %545 = vmatpush1.msra.mxu0 0.0
    %546 = vmatprep.subr.mxu0 0.0
    %547 = vmatpush1.msra.mxu0 0.0
    %548 = vmatprep.subr.mxu0 0.0
    %549 = vmatpush1.msra.mxu0 0.0
    %550 = vmatprep.subr.mxu0 0.0
    %551 = vmatpush1.msra.mxu0 0.0
    %552 = vmatprep.subr.mxu0 0.0
    %553 = vmatpush1.msra.mxu0 0.0
    %554 = vmatprep.subr.mxu0 0.0
    %555 = vmatpush1.msra.mxu0 0.0
    %556 = vmatprep.subr.mxu0 0.0
    %557 = vmatpush1.msra.mxu0 0.0
    %558 = vmatprep.subr.mxu0 0.0
    %559 = vmatpush1.msra.mxu0 0.0
    %560 = vmatprep.subr.mxu0 0.0
    %561 = vmatpush1.msra.mxu0 0.0
    %562 = vmatprep.subr.mxu0 0.0
    %563 = vmatpush1.msra.mxu0 0.0
    %564 = vmatprep.subr.mxu0 0.0
    %565 = vmatpush1.msra.mxu0 0.0
    %566 = vmatprep.subr.mxu0 0.0
    %567 = vmatpush1.msra.mxu0 0.0
    %568 = vmatprep.subr.mxu0 0.0
    %569 = vmatpush1.msra.mxu0 0.0
    %570 = vmatprep.subr.mxu0 0.0
    %571 = vmatpush1.msra.mxu0 0.0
    %572 = vmatprep.subr.mxu0 0.0
    %573 = vmatpush1.msra.mxu0 0.0
    %574 = vmatprep.subr.mxu0 0.0
    %575 = vmatpush1.msra.mxu0 0.0
    %576 = vmatprep.subr.mxu0 0.0
    %577 = vmatpush1.msra.mxu0 0.0
    %578 = vmatprep.subr.mxu0 0.0
    %579 = vmatpush1.msra.mxu0 0.0
    %580 = vmatprep.subr.mxu0 0.0
    %581 = vmatpush1.msra.mxu0 0.0
    %582 = vmatprep.subr.mxu0 0.0
    %583 = vmatpush1.msra.mxu0 0.0
    %584 = vmatprep.mubr.f32.mxu0 0.0
    %585 = vmatmul.mubr.f32.gmra.mrb[0].mxu0 %v518
    %v586 = vpop.f32.mrb[0].mxu0
    %v587 = vadd.f32 0.0, %v586
    %v588 = vpop.f32.mrb[0].mxu0
    %589 = vdwg.mxu0
    %v590 = vadd.f32 %v514, %v587
    %v591 = vxor.u32 %v590, 2147483648
    %v592 = vmul.f32 %v591, 1.442695
    %v593 = vpow.pop %v592
    %v594 = vadd.f32 %v593, 1.0
    %v595 = vrcp.pop %v594
    %v596 = vmul.f32 1.0, %v595
    %v597 = vtanh.pop %v590
    %v598 = vmul.f32 %v596, %v507
    %600 = vrot.lane.b32.xlu0 %v597, 64
    %v601 = vpop.permute.xlu0 %600
    %v603 = vmul.f32 %v596, %v601
    %605 = vrot.lane.b32.xlu0 %v603, 32
    %v606 = vpop.permute.xlu0 %605
    %v608 = vadd.f32 %v598, %v606
    %v609 = vtanh.pop %v608
    %611 = vrot.lane.b32.xlu0 %v609, 64
    %v612 = vpop.permute.xlu0 %611
    %v614 = vmul.f32 %v596, %v612
    %v615 = vld [vmem:[#allocation2 + $0x5] sm:$0x1]
    %617 = vrot.lane.b32.xlu0 %v614, 32
    %v618 = vpop.permute.xlu0 %617
    %v619 = vsel %vm33, %v618, 0
    %621 = vmatprep.subr.mxu0 0.0
    %622 = vmatpush1.msra.mxu0 %v108
    %623 = vmatprep.subr.mxu0 0.0
    %624 = vmatpush1.msra.mxu0 %v109
    %625 = vmatprep.subr.mxu0 0.0
    %626 = vmatpush1.msra.mxu0 %v110
    %627 = vmatprep.subr.mxu0 0.0
    %628 = vmatpush1.msra.mxu0 %v111
    %629 = vmatprep.subr.mxu0 0.0
    %630 = vmatpush1.msra.mxu0 0.0
    %631 = vmatprep.subr.mxu0 0.0
    %632 = vmatpush1.msra.mxu0 0.0
    %633 = vmatprep.subr.mxu0 0.0
    %634 = vmatpush1.msra.mxu0 0.0
    %635 = vmatprep.subr.mxu0 0.0
    %636 = vmatpush1.msra.mxu0 0.0
    %637 = vmatprep.subr.mxu0 0.0
    %638 = vmatpush1.msra.mxu0 0.0
    %639 = vmatprep.subr.mxu0 0.0
    %640 = vmatpush1.msra.mxu0 0.0
    %641 = vmatprep.subr.mxu0 0.0
    %642 = vmatpush1.msra.mxu0 0.0
    %643 = vmatprep.subr.mxu0 0.0
    %644 = vmatpush1.msra.mxu0 0.0
    %645 = vmatprep.subr.mxu0 0.0
    %646 = vmatpush1.msra.mxu0 0.0
    %647 = vmatprep.subr.mxu0 0.0
    %648 = vmatpush1.msra.mxu0 0.0
    %649 = vmatprep.subr.mxu0 0.0
    %650 = vmatpush1.msra.mxu0 0.0
    %651 = vmatprep.subr.mxu0 0.0
    %652 = vmatpush1.msra.mxu0 0.0
    %653 = vmatprep.subr.mxu0 0.0
    %654 = vmatpush1.msra.mxu0 0.0
    %655 = vmatprep.subr.mxu0 0.0
    %656 = vmatpush1.msra.mxu0 0.0
    %657 = vmatprep.subr.mxu0 0.0
    %658 = vmatpush1.msra.mxu0 0.0
    %659 = vmatprep.subr.mxu0 0.0
    %660 = vmatpush1.msra.mxu0 0.0
    %661 = vmatprep.subr.mxu0 0.0
    %662 = vmatpush1.msra.mxu0 0.0
    %663 = vmatprep.subr.mxu0 0.0
    %664 = vmatpush1.msra.mxu0 0.0
    %665 = vmatprep.subr.mxu0 0.0
    %666 = vmatpush1.msra.mxu0 0.0
    %667 = vmatprep.subr.mxu0 0.0
    %668 = vmatpush1.msra.mxu0 0.0
    %669 = vmatprep.subr.mxu0 0.0
    %670 = vmatpush1.msra.mxu0 0.0
    %671 = vmatprep.subr.mxu0 0.0
    %672 = vmatpush1.msra.mxu0 0.0
    %673 = vmatprep.subr.mxu0 0.0
    %674 = vmatpush1.msra.mxu0 0.0
    %675 = vmatprep.subr.mxu0 0.0
    %676 = vmatpush1.msra.mxu0 0.0
    %677 = vmatprep.subr.mxu0 0.0
    %678 = vmatpush1.msra.mxu0 0.0
    %679 = vmatprep.subr.mxu0 0.0
    %680 = vmatpush1.msra.mxu0 0.0
    %681 = vmatprep.subr.mxu0 0.0
    %682 = vmatpush1.msra.mxu0 0.0
    %683 = vmatprep.subr.mxu0 0.0
    %684 = vmatpush1.msra.mxu0 0.0
    %685 = vmatprep.mubr.f32.mxu0 0.0
    %686 = vmatmul.mubr.f32.gmra.mrb[0].mxu0 %v619
    %v687 = vpop.f32.mrb[0].mxu0
    %v688 = vadd.f32 0.0, %v687
    %v689 = vpop.f32.mrb[0].mxu0
    %690 = vdwg.mxu0
    %v691 = vadd.f32 %v615, %v688
    %v692 = vxor.u32 %v691, 2147483648
    %v693 = vmul.f32 %v692, 1.442695
    %v694 = vpow.pop %v693
    %v695 = vadd.f32 %v694, 1.0
    %v696 = vrcp.pop %v695
    %v697 = vmul.f32 1.0, %v696
    %v698 = vtanh.pop %v691
    %v699 = vmul.f32 %v697, %v608
    %701 = vrot.lane.b32.xlu0 %v698, 64
    %v702 = vpop.permute.xlu0 %701
    %v704 = vmul.f32 %v697, %v702
    %706 = vrot.lane.b32.xlu0 %v704, 32
    %v707 = vpop.permute.xlu0 %706
    %v709 = vadd.f32 %v699, %v707
    %v710 = vtanh.pop %v709
    %712 = vrot.lane.b32.xlu0 %v710, 64
    %v713 = vpop.permute.xlu0 %712
    %v715 = vmul.f32 %v697, %v713
    %v716 = vld [vmem:[#allocation2 + $0x6] sm:$0x1]
    %718 = vrot.lane.b32.xlu0 %v715, 32
    %v719 = vpop.permute.xlu0 %718
    %v720 = vsel %vm33, %v719, 0
    %722 = vmatprep.subr.mxu0 0.0
    %723 = vmatpush1.msra.mxu0 %v108
    %724 = vmatprep.subr.mxu0 0.0
    %725 = vmatpush1.msra.mxu0 %v109
    %726 = vmatprep.subr.mxu0 0.0
    %727 = vmatpush1.msra.mxu0 %v110
    %728 = vmatprep.subr.mxu0 0.0
    %729 = vmatpush1.msra.mxu0 %v111
    %730 = vmatprep.subr.mxu0 0.0
    %731 = vmatpush1.msra.mxu0 0.0
    %732 = vmatprep.subr.mxu0 0.0
    %733 = vmatpush1.msra.mxu0 0.0
    %734 = vmatprep.subr.mxu0 0.0
    %735 = vmatpush1.msra.mxu0 0.0
    %736 = vmatprep.subr.mxu0 0.0
    %737 = vmatpush1.msra.mxu0 0.0
    %738 = vmatprep.subr.mxu0 0.0
    %739 = vmatpush1.msra.mxu0 0.0
    %740 = vmatprep.subr.mxu0 0.0
    %741 = vmatpush1.msra.mxu0 0.0
    %742 = vmatprep.subr.mxu0 0.0
    %743 = vmatpush1.msra.mxu0 0.0
    %744 = vmatprep.subr.mxu0 0.0
    %745 = vmatpush1.msra.mxu0 0.0
    %746 = vmatprep.subr.mxu0 0.0
    %747 = vmatpush1.msra.mxu0 0.0
    %748 = vmatprep.subr.mxu0 0.0
    %749 = vmatpush1.msra.mxu0 0.0
    %750 = vmatprep.subr.mxu0 0.0
    %751 = vmatpush1.msra.mxu0 0.0
    %752 = vmatprep.subr.mxu0 0.0
    %753 = vmatpush1.msra.mxu0 0.0
    %754 = vmatprep.subr.mxu0 0.0
    %755 = vmatpush1.msra.mxu0 0.0
    %756 = vmatprep.subr.mxu0 0.0
    %757 = vmatpush1.msra.mxu0 0.0
    %758 = vmatprep.subr.mxu0 0.0
    %759 = vmatpush1.msra.mxu0 0.0
    %760 = vmatprep.subr.mxu0 0.0
    %761 = vmatpush1.msra.mxu0 0.0
    %762 = vmatprep.subr.mxu0 0.0
    %763 = vmatpush1.msra.mxu0 0.0
    %764 = vmatprep.subr.mxu0 0.0
    %765 = vmatpush1.msra.mxu0 0.0
    %766 = vmatprep.subr.mxu0 0.0
    %767 = vmatpush1.msra.mxu0 0.0
    %768 = vmatprep.subr.mxu0 0.0
    %769 = vmatpush1.msra.mxu0 0.0
    %770 = vmatprep.subr.mxu0 0.0
    %771 = vmatpush1.msra.mxu0 0.0
    %772 = vmatprep.subr.mxu0 0.0
    %773 = vmatpush1.msra.mxu0 0.0
    %774 = vmatprep.subr.mxu0 0.0
    %775 = vmatpush1.msra.mxu0 0.0
    %776 = vmatprep.subr.mxu0 0.0
    %777 = vmatpush1.msra.mxu0 0.0
    %778 = vmatprep.subr.mxu0 0.0
    %779 = vmatpush1.msra.mxu0 0.0
    %780 = vmatprep.subr.mxu0 0.0
    %781 = vmatpush1.msra.mxu0 0.0
    %782 = vmatprep.subr.mxu0 0.0
    %783 = vmatpush1.msra.mxu0 0.0
    %784 = vmatprep.subr.mxu0 0.0
    %785 = vmatpush1.msra.mxu0 0.0
    %786 = vmatprep.mubr.f32.mxu0 0.0
    %787 = vmatmul.mubr.f32.gmra.mrb[0].mxu0 %v720
    %v788 = vpop.f32.mrb[0].mxu0
    %v789 = vadd.f32 0.0, %v788
    %v790 = vpop.f32.mrb[0].mxu0
    %791 = vdwg.mxu0
    %v792 = vadd.f32 %v716, %v789
    %v793 = vxor.u32 %v792, 2147483648
    %v794 = vmul.f32 %v793, 1.442695
    %v795 = vpow.pop %v794
    %v796 = vadd.f32 %v795, 1.0
    %v797 = vrcp.pop %v796
    %v798 = vmul.f32 1.0, %v797
    %v799 = vtanh.pop %v792
    %v800 = vmul.f32 %v798, %v709
    %802 = vrot.lane.b32.xlu0 %v799, 64
    %v803 = vpop.permute.xlu0 %802
    %v805 = vmul.f32 %v798, %v803
    %807 = vrot.lane.b32.xlu0 %v805, 32
    %v808 = vpop.permute.xlu0 %807
    %v810 = vadd.f32 %v800, %v808
    %v811 = vtanh.pop %v810
    %813 = vrot.lane.b32.xlu0 %v811, 64
    %v814 = vpop.permute.xlu0 %813
    %v816 = vmul.f32 %v798, %v814
    %v817 = vld [vmem:[#allocation2 + $0x7] sm:$0x1]
    %819 = vrot.lane.b32.xlu0 %v816, 32
    %v820 = vpop.permute.xlu0 %819
    %v821 = vsel %vm33, %v820, 0
    %823 = vmatprep.subr.mxu0 0.0
    %824 = vmatpush1.msra.mxu0 %v108
    %825 = vmatprep.subr.mxu0 0.0
    %826 = vmatpush1.msra.mxu0 %v109
    %827 = vmatprep.subr.mxu0 0.0
    %828 = vmatpush1.msra.mxu0 %v110
    %829 = vmatprep.subr.mxu0 0.0
    %830 = vmatpush1.msra.mxu0 %v111
    %831 = vmatprep.subr.mxu0 0.0
    %832 = vmatpush1.msra.mxu0 0.0
    %833 = vmatprep.subr.mxu0 0.0
    %834 = vmatpush1.msra.mxu0 0.0
    %835 = vmatprep.subr.mxu0 0.0
    %836 = vmatpush1.msra.mxu0 0.0
    %837 = vmatprep.subr.mxu0 0.0
    %838 = vmatpush1.msra.mxu0 0.0
    %839 = vmatprep.subr.mxu0 0.0
    %840 = vmatpush1.msra.mxu0 0.0
    %841 = vmatprep.subr.mxu0 0.0
    %842 = vmatpush1.msra.mxu0 0.0
    %843 = vmatprep.subr.mxu0 0.0
    %844 = vmatpush1.msra.mxu0 0.0
    %845 = vmatprep.subr.mxu0 0.0
    %846 = vmatpush1.msra.mxu0 0.0
    %847 = vmatprep.subr.mxu0 0.0
    %848 = vmatpush1.msra.mxu0 0.0
    %849 = vmatprep.subr.mxu0 0.0
    %850 = vmatpush1.msra.mxu0 0.0
    %851 = vmatprep.subr.mxu0 0.0
    %852 = vmatpush1.msra.mxu0 0.0
    %853 = vmatprep.subr.mxu0 0.0
    %854 = vmatpush1.msra.mxu0 0.0
    %855 = vmatprep.subr.mxu0 0.0
    %856 = vmatpush1.msra.mxu0 0.0
    %857 = vmatprep.subr.mxu0 0.0
    %858 = vmatpush1.msra.mxu0 0.0
    %859 = vmatprep.subr.mxu0 0.0
    %860 = vmatpush1.msra.mxu0 0.0
    %861 = vmatprep.subr.mxu0 0.0
    %862 = vmatpush1.msra.mxu0 0.0
    %863 = vmatprep.subr.mxu0 0.0
    %864 = vmatpush1.msra.mxu0 0.0
    %865 = vmatprep.subr.mxu0 0.0
    %866 = vmatpush1.msra.mxu0 0.0
    %867 = vmatprep.subr.mxu0 0.0
    %868 = vmatpush1.msra.mxu0 0.0
    %869 = vmatprep.subr.mxu0 0.0
    %870 = vmatpush1.msra.mxu0 0.0
    %871 = vmatprep.subr.mxu0 0.0
    %872 = vmatpush1.msra.mxu0 0.0
    %873 = vmatprep.subr.mxu0 0.0
    %874 = vmatpush1.msra.mxu0 0.0
    %875 = vmatprep.subr.mxu0 0.0
    %876 = vmatpush1.msra.mxu0 0.0
    %877 = vmatprep.subr.mxu0 0.0
    %878 = vmatpush1.msra.mxu0 0.0
    %879 = vmatprep.subr.mxu0 0.0
    %880 = vmatpush1.msra.mxu0 0.0
    %881 = vmatprep.subr.mxu0 0.0
    %882 = vmatpush1.msra.mxu0 0.0
    %883 = vmatprep.subr.mxu0 0.0
    %884 = vmatpush1.msra.mxu0 0.0
    %885 = vmatprep.subr.mxu0 0.0
    %886 = vmatpush1.msra.mxu0 0.0
    %887 = vmatprep.mubr.f32.mxu0 0.0
    %888 = vmatmul.mubr.f32.gmra.mrb[0].mxu0 %v821
    %v889 = vpop.f32.mrb[0].mxu0
    %v890 = vadd.f32 0.0, %v889
    %v891 = vpop.f32.mrb[0].mxu0
    %892 = vdwg.mxu0
    %v893 = vadd.f32 %v817, %v890
    %v894 = vxor.u32 %v893, 2147483648
    %v895 = vmul.f32 %v894, 1.442695
    %v896 = vpow.pop %v895
    %v897 = vadd.f32 %v896, 1.0
    %v898 = vrcp.pop %v897
    %v899 = vmul.f32 1.0, %v898
    %v900 = vtanh.pop %v893
    %v901 = vmul.f32 %v899, %v810
    %903 = vrot.lane.b32.xlu0 %v900, 64
    %v904 = vpop.permute.xlu0 %903
    %v906 = vmul.f32 %v899, %v904
    %908 = vrot.lane.b32.xlu0 %v906, 32
    %v909 = vpop.permute.xlu0 %908
    %v911 = vadd.f32 %v901, %v909
    %v912 = vtanh.pop %v911
    %914 = vrot.lane.b32.xlu0 %v912, 64
    %v915 = vpop.permute.xlu0 %914
    %v917 = vmul.f32 %v899, %v915
    %919 = vrot.lane.b32.xlu0 %v917, 32
    %v920 = vpop.permute.xlu0 %919
    %vm922 = vcmask 253952
    %923 = vst.msk [vmem:[#allocation3] sm:$0x1] %vm922, %v920
    %925 = vrot.lane.b32.xlu0 %v911, 96
    %v926 = vpop.permute.xlu0 %925
    %928 = vst.msk [vmem:[#allocation5] sm:$0x1] %vm922, %v926
    // Predicated region
    $region18: #{lstm_encoder_forward.1} parent=1 // pred_check
      _
    $region19: #{lstm_encoder_forward.1} parent=1 // pred_check_branch
      %930 = sbr.rel (0) target = $region21
    $region20: #{lstm_encoder_forward.1} parent=1 // pred_region
      %s932 = ssub.s32 16, 16
      %933 = vsyncadd [#allocation4], %s932
      %s935 = sshll.u32 [#allocation3], 4
      %s936 = int_to_ptr.vmem [resolvable:$true] %s935
      %938 = dma.vmem_to_hbm [thread:$0]  %s936, 16, %s4, [#allocation4]
    $region21: #{lstm_encoder_forward.1} parent=1 // pred_fallthru
      _
    // Predicated region
    $region22: #{lstm_encoder_forward.1} parent=1 // pred_check
      _
    $region23: #{lstm_encoder_forward.1} parent=1 // pred_check_branch
      %940 = sbr.rel (0) target = $region25
    $region24: #{lstm_encoder_forward.1} parent=1 // pred_region
      %s942 = ssub.s32 16, 16
      %943 = vsyncadd [#allocation6], %s942
      %s945 = sshll.u32 [#allocation5], 4
      %s946 = int_to_ptr.vmem [resolvable:$true] %s945
      %948 = dma.vmem_to_hbm [thread:$0]  %s946, 16, %s5, [#allocation6]
    $region25: #{lstm_encoder_forward.1} parent=1 // pred_fallthru
      _
    // Predicated region
    $region26: #{lstm_encoder_forward.1} parent=1 // pred_check
      _
    $region27: #{lstm_encoder_forward.1} parent=1 // pred_check_branch
      %950 = sbr.rel (0) target = $region29
    $region28: #{lstm_encoder_forward.1} parent=1 // pred_region
      %951 = dma.done [#allocation4], 16
    $region29: #{lstm_encoder_forward.1} parent=1 // pred_fallthru
      _
    // Predicated region
    $region30: #{lstm_encoder_forward.1} parent=1 // pred_check
      _
    $region31: #{lstm_encoder_forward.1} parent=1 // pred_check_branch
      %953 = sbr.rel (0) target = $region33
    $region32: #{lstm_encoder_forward.1} parent=1 // pred_region
      %954 = dma.done [#allocation6], 16
    $region33: #{lstm_encoder_forward.1} parent=1 // pred_fallthru
      _
    %955 = vsyncpa [#allocation4], 1
    %956 = vsyncpa [#allocation6], 1

</llo_original>
